<compile_context>
chip_gen: v7x
topology: tpu7x:2x2x1
jax: 0.10.0
libtpu: 0.0.40
codegen_flags: <defaults>
</compile_context>

<pallas_src>
import functools

import jax
import jax.numpy as jnp
from jax.experimental import pallas as pl
from jax.experimental.pallas import tpu as pltpu

LANE = 128
MAX_TILE_B = 32768        # lanes per grid step (review: 16K–64K sweet spot)
PALLAS_MIN_BATCH = 4096   # below this, a fused XLA affine is strictly faster


def _round_up(n, m):
    return ((n + m - 1) // m) * m


def _fused_linear_kernel(xt_ref, w_ref, b_ref, o_ref):
    # xt_ref: (F, TILE_B) VMEM  -- features on sublanes, batch on lanes
    # w_ref : (F, 1)      VMEM  -- folded weight column  w2 * w1
    # b_ref : (1, 1)      SMEM  -- folded bias           w2 * b1 + b2
    # o_ref : (1, TILE_B) VMEM  -- lane-dense output row
    prod = xt_ref[...] * w_ref[...]                       # full-vreg VALU mul (lane bcast)
    o_ref[...] = jnp.sum(prod, axis=0, keepdims=True) + b_ref[0, 0]  # sublane reduce on XLU


def _fold_params(w1, b1, w2, b2):
    # out = x @ (w2*w1).T + (w2*b1 + b2)   (rounding order differs bitwise
    # from the two-stage reference but is well within f32 tolerance).
    F = w1.shape[1]
    w_col = (w2[0, 0] * w1).reshape(F, 1).astype(jnp.float32)              # (F, 1)
    b_fold = (w2[0, 0] * b1[0] + b2[0]).reshape(1, 1).astype(jnp.float32)  # (1, 1)
    return w_col, b_fold


def abstracted_transformer(x, w1, b1, w2, b2, *, tile_b=MAX_TILE_B,
                           force_pallas=False):
    """x: (B, 10) f32; w1: (1, 10); b1: (1,); w2: (1, 1); b2: (1,) -> (B, 1)."""
    x = x.astype(jnp.float32)
    B, F = x.shape
    w_col, b_fold = _fold_params(w1, b1, w2, b2)

    # Fast path: at the module's real batch (B ~ 1-2) launch + layout plumbing
    # dominate, so a plain fused XLA affine wins by orders of magnitude.
    if not force_pallas and B < PALLAS_MIN_BATCH:
        return x @ w_col + b_fold[0]                       # (B, 1)

    # --- tile / grid selection -------------------------------------------
    # Force tile_b to a multiple of 128 (lane-divisibility rule), floor 128.
    tile_b = max(LANE, (int(tile_b) // LANE) * LANE)
    # Pad batch only to a multiple of 128 (not a full tile): bounded waste.
    b_pad = _round_up(B, LANE)
    if b_pad >= 2 * LANE:
        # Guarantee >= 2 grid steps when there are >= 2 lane-tiles of work so
        # v7x megacore sharding actually engages (no-op on v5e/v6e: 1 TC).
        tile_b = min(tile_b, _round_up(pl.cdiv(b_pad, 2), LANE))
    else:
        tile_b = min(tile_b, b_pad)
    grid_b = pl.cdiv(b_pad, tile_b)   # last block may overhang; safe (see header)

    # Lane-dense layout: batch on the 128-lane axis, features on sublanes.
    # Single fused pad+transpose pass (no zeros+scatter materialization).
    xt = jnp.pad(x, ((0, b_pad - B), (0, 0))).T            # (F, b_pad)

    out_t = pl.pallas_call(
        _fused_linear_kernel,
        out_shape=jax.ShapeDtypeStruct((1, b_pad), jnp.float32),
        grid=(grid_b,),
        in_specs=[
            pl.BlockSpec((F, tile_b), lambda i: (0, i)),
            pl.BlockSpec((F, 1), lambda i: (0, 0)),
            pl.BlockSpec(memory_space=pltpu.MemorySpace.SMEM),
        ],
        out_specs=pl.BlockSpec((1, tile_b), lambda i: (0, i)),
        compiler_params=pltpu.CompilerParams(
            dimension_semantics=("parallel",)),
    )(xt, w_col, b_fold)

    # Layout plumbing back to the module's (B, 1) output; drops pad columns.
    return out_t[0, :B].reshape(B, 1)


def init_params(key):
    # nn.Linear-shaped params:
    #   abstracted_encoder:     weight (1, 10), bias (1,)
    #   abstracted_transformer: weight (1, 1),  bias (1,)
    k1, k2, k3, k4 = jax.random.split(key, 4)
    bound1 = 1.0 / jnp.sqrt(10.0)   # PyTorch default: U(-1/sqrt(fan_in), ...)
    bound2 = 1.0
    w1 = jax.random.uniform(k1, (1, 10), jnp.float32, -bound1, bound1)
    b1 = jax.random.uniform(k2, (1,), jnp.float32, -bound1, bound1)
    w2 = jax.random.uniform(k3, (1, 1), jnp.float32, -bound2, bound2)
    b2 = jax.random.uniform(k4, (1,), jnp.float32, -bound2, bound2)
    return w1, b1, w2, b2


def reference_forward(x, w1, b1, w2, b2):
    h = x @ w1.T + b1          # Linear(10, 1)
    return h @ w2.T + b2       # Linear(1, 1)


if __name__ == "__main__":
    key = jax.random.PRNGKey(0)
    kx, kp = jax.random.split(key)
    w1, b1, w2, b2 = init_params(kp)

    # 1) Small shape consistent with the module (dummy_input = randn(1, 10)),
    #    forcing the Pallas path so the kernel actually executes.
    B = 2
    x = jax.random.normal(kx, (B, 10), jnp.float32)
    out = jax.block_until_ready(
        abstracted_transformer(x, w1, b1, w2, b2, force_pallas=True))
    ref = reference_forward(x, w1, b1, w2, b2)
    assert out.shape == (B, 1)
    assert jnp.allclose(out, ref, atol=1e-5, rtol=1e-5), (out, ref)

    # 2) Exercise the batch grid: multiple tiles + 128-padded overhanging tail.
    B2 = 300
    x2 = jax.random.normal(jax.random.PRNGKey(1), (B2, 10), jnp.float32)
    out2 = jax.block_until_ready(
        abstracted_transformer(x2, w1, b1, w2, b2, tile_b=128,
                               force_pallas=True))
    ref2 = reference_forward(x2, w1, b1, w2, b2)
    assert out2.shape == (B2, 1)
    assert jnp.allclose(out2, ref2, atol=1e-5, rtol=1e-5)

    # 3) Auto path above the threshold (large tile, >=2 grid steps).
    B3 = 4500
    x3 = jax.random.normal(jax.random.PRNGKey(2), (B3, 10), jnp.float32)
    out3 = jax.block_until_ready(abstracted_transformer(x3, w1, b1, w2, b2))
    ref3 = reference_forward(x3, w1, b1, w2, b2)
    assert out3.shape == (B3, 1)
    assert jnp.allclose(out3, ref3, atol=1e-5, rtol=1e-5)

    # 4) Small-batch XLA fast path (what the module actually hits at B=1-2).
    out_fast = jax.block_until_ready(abstracted_transformer(x, w1, b1, w2, b2))
    assert jnp.allclose(out_fast, ref, atol=1e-5, rtol=1e-5)

    print("KERNEL_OK")
</pallas_src>

<mosaic_0001>
module attributes {stable_mosaic.version = 11 : i64} {
  func.func @_fused_linear_kernel(%arg0: i32, %arg1: memref<10x128xf32, #tpu.memory_space<vmem>>, %arg2: memref<10x1xf32, #tpu.memory_space<vmem>>, %arg3: memref<1x1xf32, #tpu.memory_space<smem>>, %arg4: memref<1x128xf32, #tpu.memory_space<vmem>>) attributes {dimension_semantics = [#tpu.dimension_semantics<parallel>], iteration_bounds = array<i64: 1>, scalar_prefetch = 0 : i64, scratch_operands = 0 : i64, tpu.core_type = #tpu.core_type<tc>, window_params = [{transform_indices = @transform_0, window_bounds = array<i64: 10, 128>}, {pipeline_mode = #tpu.pipeline_mode<synchronous>, transform_indices = @transform_1, window_bounds = array<i64: 10, 1>}, {transform_indices = @transform_2, window_bounds = array<i64: 1, 1>}, {transform_indices = @transform_3, window_bounds = array<i64: 1, 128>}]} {
    %c0 = arith.constant 0 : index
    %c0_0 = arith.constant 0 : index
    %0 = vector.load %arg1[%c0, %c0_0] : memref<10x128xf32, #tpu.memory_space<vmem>>, vector<10x128xf32>
    %c0_1 = arith.constant 0 : index
    %c0_2 = arith.constant 0 : index
    %1 = vector.load %arg2[%c0_1, %c0_2] : memref<10x1xf32, #tpu.memory_space<vmem>>, vector<10x1xf32>
    %2 = vector.broadcast %1 : vector<10x1xf32> to vector<10x128xf32>
    %3 = arith.mulf %0, %2 : vector<10x128xf32>
    %cst = arith.constant dense<0.000000e+00> : vector<128xf32>
    %4 = vector.multi_reduction <add>, %3, %cst [0] : vector<10x128xf32> to vector<128xf32>
    %5 = vector.shape_cast %4 : vector<128xf32> to vector<1x128xf32>
    %c0_3 = arith.constant 0 : index
    %c0_4 = arith.constant 0 : index
    %6 = memref.load %arg3[%c0_3, %c0_4] : memref<1x1xf32, #tpu.memory_space<smem>>
    %7 = vector.broadcast %6 : f32 to vector<1x128xf32>
    %8 = arith.addf %5, %7 : vector<1x128xf32>
    %c0_5 = arith.constant 0 : index
    %c0_6 = arith.constant 0 : index
    %9 = vector.load %arg4[%c0_5, %c0_6] : memref<1x128xf32, #tpu.memory_space<vmem>>, vector<1x128xf32>
    tpu.vector_store %arg4[%c0_5, %c0_6], %8 {strides = array<i32>} : memref<1x128xf32, #tpu.memory_space<vmem>>, vector<1x128xf32>,
    return
  }
  func.func @transform_0(%arg0: i32) -> (i32, i32) {
    %c0_i32 = arith.constant 0 : i32
    %c0_i32_0 = arith.constant 0 : i32
    return %c0_i32, %arg0 : i32, i32
  }
  func.func @transform_1(%arg0: i32) -> (i32, i32) {
    %c0_i32 = arith.constant 0 : i32
    %c0_i32_0 = arith.constant 0 : i32
    %c0_i32_1 = arith.constant 0 : i32
    return %c0_i32, %c0_i32_0 : i32, i32
  }
  func.func @transform_2(%arg0: i32) -> (i32, i32) {
    %c0_i32 = arith.constant 0 : i32
    %c0_i32_0 = arith.constant 0 : i32
    %c0_i32_1 = arith.constant 0 : i32
    return %c0_i32, %c0_i32_0 : i32, i32
  }
  func.func @transform_3(%arg0: i32) -> (i32, i32) {
    %c0_i32 = arith.constant 0 : i32
    %c0_i32_0 = arith.constant 0 : i32
    return %c0_i32, %arg0 : i32, i32
  }
}

</mosaic_0001>

<llo_original>
// kernel: tpu_custom_call.1
$region0: #{tpu_custom_call.1}
  #allocation0 [shape = 'u32[]', space=smem, size = 0x4, offset = 0x4, fixed_abs, tag = 'smem constant byte address 0x4 - core index']
  #allocation1 [shape = 'u32[144,128]{1,0:T(1,128)}', space=vmem, size = 0x12000, scoped, tag = 'internal scratch']
  #allocation2 [shape = 'f32[1,1]{1,0:T(1,128)S(6)}', space=smem, size = 0x200, scoped, tag = 'scoped memory for tpu_custom_call.1']
  %s0 = inlined_call_operand.vmem [shape: f32[10,128], index: 0, kind: input, shape index: {}]
  %s1 = inlined_call_operand.vmem [shape: f32[10,1], index: 1, kind: input, shape index: {}]
  %s2 = inlined_call_operand.<no memory space> [shape: f32[1,1], index: 2, kind: input, shape index: {}]
  %s3 = inlined_call_operand.hbm [shape: f32[1,128], index: 3, kind: output, shape index: {}]
  %s4 = sld [smem:[#allocation0]]
  $region22: #{tpu_custom_call.1} parent=0
    _
  %s6 = ssub.s32 1, %s4
  %s7 = scalar_select 0, %s6, %s4
  %8 = sst [smem:[#allocation2]] %s2
  $region1: #{tpu_custom_call.1} parent=0
    #allocation3 [shape = 'u8[512]{0}', space=vmem, size = 0x400, scoped, tag = 'output window, operand 0, single buffered']
    #allocation4 [shape = 's32[1]{0}', space=sflag, size = 0x4, scoped, tag = 'scoped memory for tpu_custom_call.1']
    %9 = vsyncpa [#allocation4], 0
    // Predicated region
    $region2: #{tpu_custom_call.1} parent=1 // pred_check
      _
    $region3: #{tpu_custom_call.1} parent=1 // pred_check_branch
      %11 = sbr.rel (0) target = $region5
    $region4: #{tpu_custom_call.1} parent=1 // pred_region
      _
    $region5: #{tpu_custom_call.1} parent=1 // pred_fallthru
      _
    // Predicated region
    $region6: #{tpu_custom_call.1} parent=1 // pred_check
      _
    $region7: #{tpu_custom_call.1} parent=1 // pred_check_branch
      %13 = sbr.rel (0) target = $region9
    $region8: #{tpu_custom_call.1} parent=1 // pred_region
      _
    $region9: #{tpu_custom_call.1} parent=1 // pred_fallthru
      _
    // Predicated region
    $region10: #{tpu_custom_call.1} parent=1 // pred_check
      _
    $region11: #{tpu_custom_call.1} parent=1 // pred_check_branch
      %15 = sbr.rel (0) target = $region13
    $region12: #{tpu_custom_call.1} parent=1 // pred_region
      _
    $region13: #{tpu_custom_call.1} parent=1 // pred_fallthru
      _
    %v16 = vld [vmem:[%s0] sm:$0xff]
    %v17 = vld [vmem:[%s0 + $0x8] sm:$0x3]
    %v18 = vld [vmem:[%s1] sm:$0xff]
    %v19 = vld [vmem:[%s1 + $0x8] sm:$0x3]
    %21 = vset.pattern.permute.xlu0 0
    %22 = vperm.xlu0 %21, %v18
    %v23 = vpop.permute.xlu0 %22
    %26 = vset.pattern.permute.xlu0 0
    %27 = vperm.xlu0 %26, %v19
    %v28 = vpop.permute.xlu0 %27
    %v30 = vmul.f32 %v16, %v23
    %v31 = vmul.f32 %v17, %v28
    %vm32 = vcmask 1041408
    %v33 = vsel %vm32, %v31, 0.0
    %v34 = vadd.f32 %v30, %v33
    %v35 = vrot.slane %v34, 4
    %v36 = vadd.f32 %v34, %v35
    %v37 = vrot.slane %v36, 2
    %v38 = vadd.f32 %v36, %v37
    %v39 = vrot.slane %v38, 1
    %v40 = vadd.f32 %v38, %v39
    %s41 = sld [smem:[#allocation2]]
    %v42 = vstv %s41
    %v43 = vadd.f32 %v40, %v42
    %44 = vst [vmem:[#allocation3] sm:$0x1] %v43
    // Predicated region
    $region14: #{tpu_custom_call.1} parent=1 // pred_check
      _
    $region15: #{tpu_custom_call.1} parent=1 // pred_check_branch
      %46 = sbr.rel (0) target = $region17
    $region16: #{tpu_custom_call.1} parent=1 // pred_region
      %s48 = ssub.s32 16, 16
      %49 = vsyncadd [#allocation4], %s48
      %s51 = sshll.u32 [#allocation3], 4
      %s52 = int_to_ptr.vmem [resolvable:$true] %s51
      %54 = dma.vmem_to_hbm [thread:$0]  %s52, 16, %s3, [#allocation4]
    $region17: #{tpu_custom_call.1} parent=1 // pred_fallthru
      _
    // Predicated region
    $region18: #{tpu_custom_call.1} parent=1 // pred_check
      _
    $region19: #{tpu_custom_call.1} parent=1 // pred_check_branch
      %56 = sbr.rel (0) target = $region21
    $region20: #{tpu_custom_call.1} parent=1 // pred_region
      %57 = dma.done [#allocation4], 16
    $region21: #{tpu_custom_call.1} parent=1 // pred_fallthru
      _
    %58 = vsyncpa [#allocation4], 1

</llo_original>
